<compile_context>
chip_gen: v7x
topology: tpu7x:2x2x1
jax: 0.10.0
libtpu: 0.0.40
codegen_flags: <defaults>
</compile_context>

<pallas_src>
import jax
import jax.numpy as jnp
from jax.experimental import pallas as pl
from jax.experimental.pallas import tpu as pltpu


def dirichlet_kernel(x_ref, mt_ref, o_ref, acc_ref):
    # x_ref  : (TR, TJ)     f32   rows = flattened (batch, channel)
    # mt_ref : (TJ, M_pad)  f32   Mfix^T tile (zero-padded columns)
    # o_ref  : (1, 1, TR)   f32   per-row sum of squares (lane-dense)
    # acc_ref: (TR, M_pad)  f32   matmul accumulator over J tiles
    k = pl.program_id(1)

    @pl.when(k == 0)
    def _():
        acc_ref[...] = jnp.zeros_like(acc_ref)

    # diri[r, i] += sum_j x[r, j] * MfixT[j, i]   (MXU, f32 accumulate)
    acc_ref[...] += jnp.dot(
        x_ref[...], mt_ref[...], preferred_element_type=jnp.float32
    )

    @pl.when(k == pl.num_programs(1) - 1)
    def _():
        d = acc_ref[...]
        # Per-row sum of squares; padded M columns are exactly zero so they
        # contribute nothing.
        o_ref[...] = jnp.sum(d * d, axis=1).reshape(1, 1, -1)


def _round_up(a, b):
    return (a + b - 1) // b * b


def dirichlet(x, Mfix, *, tj_cap=2048):
    """x: (B, C, N, N) f32, Mfix: (M, N*N) f32  ->  (B,) f32."""
    B, C, N, N2 = x.shape
    J = N * N2
    M, J2 = Mfix.shape
    assert J2 == J, (Mfix.shape, J)
    R = B * C

    xr = x.reshape(R, J).astype(jnp.float32)
    MT = jnp.transpose(Mfix.astype(jnp.float32))  # (J, M)

    # Row (batch*channel) padding / tile: zero rows contribute 0 to the sums.
    if R <= 128:
        R_pad = _round_up(R, 8)
        TR = R_pad
    else:
        TR = 128
        R_pad = _round_up(R, TR)

    # Output-column padding: zero columns of Mfix^T give zero diri entries.
    M_pad = _round_up(M, 128)

    # Contraction-axis (J) tile: cap so the Mfix^T tile (TJ x M_pad, double
    # buffered) stays within ~8 MiB of VMEM even for large M.
    bytes_per_j_row = 4 * M_pad
    tj_cap_vmem = max(128, ((8 << 20) // bytes_per_j_row) // 128 * 128)
    tj_cap = max(128, min(tj_cap, tj_cap_vmem))

    J_pad = _round_up(J, 128)
    if J_pad <= tj_cap:
        TJ = J_pad
    else:
        TJ = tj_cap
        J_pad = _round_up(J, TJ)

    xr = jnp.pad(xr, ((0, R_pad - R), (0, J_pad - J)))
    MT = jnp.pad(MT, ((0, J_pad - J), (0, M_pad - M)))

    nr = R_pad // TR
    nk = J_pad // TJ

    out = pl.pallas_call(
        dirichlet_kernel,
        out_shape=jax.ShapeDtypeStruct((nr, 1, TR), jnp.float32),
        grid_spec=pltpu.PrefetchScalarGridSpec(
            num_scalar_prefetch=0,
            grid=(nr, nk),
            in_specs=[
                pl.BlockSpec((TR, TJ), lambda r, k: (r, k)),     # x rows tile
                pl.BlockSpec((TJ, M_pad), lambda r, k: (k, 0)),  # Mfix^T tile
            ],
            out_specs=pl.BlockSpec((1, 1, TR), lambda r, k: (r, 0, 0)),
            scratch_shapes=[pltpu.VMEM((TR, M_pad), jnp.float32)],
        ),
        compiler_params=pltpu.CompilerParams(
            dimension_semantics=("parallel", "arbitrary"),
            vmem_limit_bytes=32 << 20,
        ),
    )(xr, MT)

    per_row = out.reshape(R_pad)[:R]          # sum_i diri[r, i]^2 per row
    return per_row.reshape(B, C).sum(axis=1)  # fold channels -> (B,)


def dirichlet_ref(x, Mfix):
    xr = x.reshape(x.shape[0], x.shape[1], -1)
    diri = jnp.einsum('ij,klj->kli', Mfix, xr)
    return jnp.sum(jnp.square(diri), axis=(1, 2))


def make_boundary_matrix(N):
    """Deterministic Mfix: selects the 4*N-4 boundary nodes of an N x N grid."""
    rows = []
    for r in range(N):
        for c in range(N):
            if r == 0 or r == N - 1 or c == 0 or c == N - 1:
                rows.append(r * N + c)
    M = len(rows)  # 4*N - 4
    Mfix = jnp.zeros((M, N * N), dtype=jnp.float32)
    Mfix = Mfix.at[jnp.arange(M), jnp.asarray(rows)].set(1.0)
    return Mfix


if __name__ == "__main__":
    B, C, N = 2, 2, 16  # input is (batch, 2, N, N) per the module docstring
    key = jax.random.PRNGKey(0)
    x = jax.random.normal(key, (B, C, N, N), dtype=jnp.float32)
    Mfix = make_boundary_matrix(N)  # (60, 256), deterministic

    out = dirichlet(x, Mfix)
    out = jax.block_until_ready(out)

    ref = dirichlet_ref(x, Mfix)
    assert out.shape == (B,)
    assert jnp.allclose(out, ref, rtol=1e-5, atol=1e-4), (out, ref)
    print("KERNEL_OK")
</pallas_src>

<mosaic_0001>
module attributes {stable_mosaic.version = 11 : i64} {
  func.func @dirichlet_kernel(%arg0: i32, %arg1: i32, %arg2: memref<8x256xf32, #tpu.memory_space<vmem>>, %arg3: memref<256x128xf32, #tpu.memory_space<vmem>>, %arg4: memref<1x1x8xf32, #tpu.memory_space<vmem>>, %arg5: memref<8x128xf32, #tpu.memory_space<vmem>>) attributes {dimension_semantics = [#tpu.dimension_semantics<parallel>, #tpu.dimension_semantics<arbitrary>], iteration_bounds = array<i64: 1, 1>, scalar_prefetch = 0 : i64, scratch_operands = 1 : i64, tpu.core_type = #tpu.core_type<tc>, window_params = [{transform_indices = @transform_0, window_bounds = array<i64: 8, 256>}, {transform_indices = @transform_1, window_bounds = array<i64: 256, 128>}, {transform_indices = @transform_2, window_bounds = array<i64: 1, 1, 8>}]} {
    %c0_i32 = arith.constant 0 : i32
    %0 = arith.cmpi eq, %arg1, %c0_i32 : i32
    %1 = arith.extui %0 : i1 to i32
    %c0_i32_0 = arith.constant 0 : i32
    %2 = arith.cmpi ne, %1, %c0_i32_0 : i32
    scf.if %2 {
      %cst_10 = arith.constant 0.000000e+00 : f32
      %12 = vector.broadcast %cst_10 : f32 to vector<8x128xf32>
      %c0_11 = arith.constant 0 : index
      %c0_12 = arith.constant 0 : index
      %13 = vector.load %arg5[%c0_11, %c0_12] : memref<8x128xf32, #tpu.memory_space<vmem>>, vector<8x128xf32>
      tpu.vector_store %arg5[%c0_11, %c0_12], %12 {strides = array<i32>} : memref<8x128xf32, #tpu.memory_space<vmem>>, vector<8x128xf32>,
    } else {
    }
    %c0 = arith.constant 0 : index
    %c0_1 = arith.constant 0 : index
    %3 = vector.load %arg5[%c0, %c0_1] : memref<8x128xf32, #tpu.memory_space<vmem>>, vector<8x128xf32>
    %c0_2 = arith.constant 0 : index
    %c0_3 = arith.constant 0 : index
    %4 = vector.load %arg2[%c0_2, %c0_3] : memref<8x256xf32, #tpu.memory_space<vmem>>, vector<8x256xf32>
    %c0_4 = arith.constant 0 : index
    %c0_5 = arith.constant 0 : index
    %5 = vector.load %arg3[%c0_4, %c0_5] : memref<256x128xf32, #tpu.memory_space<vmem>>, vector<256x128xf32>
    %cst = arith.constant dense<0.000000e+00> : vector<8x128xf32>
    %6 = tpu.matmul %4, %5, %cst {dimension_numbers = #tpu.dot_dimension_numbers<[1], [0], [0], [1], [0, 0, 1, 1], [], []>} : vector<8x256xf32>, vector<256x128xf32>, vector<8x128xf32> -> vector<8x128xf32>
    %7 = arith.addf %3, %6 : vector<8x128xf32>
    %c0_6 = arith.constant 0 : index
    %c0_7 = arith.constant 0 : index
    %8 = vector.load %arg5[%c0_6, %c0_7] : memref<8x128xf32, #tpu.memory_space<vmem>>, vector<8x128xf32>
    tpu.vector_store %arg5[%c0_6, %c0_7], %7 {strides = array<i32>} : memref<8x128xf32, #tpu.memory_space<vmem>>, vector<8x128xf32>,
    %c0_i32_8 = arith.constant 0 : i32
    %9 = arith.cmpi eq, %arg1, %c0_i32_8 : i32
    %10 = arith.extui %9 : i1 to i32
    %c0_i32_9 = arith.constant 0 : i32
    %11 = arith.cmpi ne, %10, %c0_i32_9 : i32
    scf.if %11 {
      %c0_10 = arith.constant 0 : index
      %c0_11 = arith.constant 0 : index
      %12 = vector.load %arg5[%c0_10, %c0_11] : memref<8x128xf32, #tpu.memory_space<vmem>>, vector<8x128xf32>
      %13 = arith.mulf %12, %12 : vector<8x128xf32>
      %cst_12 = arith.constant dense<0.000000e+00> : vector<8xf32>
      %14 = vector.multi_reduction <add>, %13, %cst_12 [1] : vector<8x128xf32> to vector<8xf32>
      %15 = vector.shape_cast %14 : vector<8xf32> to vector<1x1x8xf32>
      %c0_13 = arith.constant 0 : index
      %c0_14 = arith.constant 0 : index
      %c0_15 = arith.constant 0 : index
      %16 = vector.load %arg4[%c0_13, %c0_14, %c0_15] : memref<1x1x8xf32, #tpu.memory_space<vmem>>, vector<1x1x8xf32>
      tpu.vector_store %arg4[%c0_13, %c0_14, %c0_15], %15 {strides = array<i32>} : memref<1x1x8xf32, #tpu.memory_space<vmem>>, vector<1x1x8xf32>,
    } else {
    }
    return
  }
  func.func @transform_0(%arg0: i32, %arg1: i32) -> (i32, i32) {
    %c0_i32 = arith.constant 0 : i32
    return %arg0, %arg1 : i32, i32
  }
  func.func @transform_1(%arg0: i32, %arg1: i32) -> (i32, i32) {
    %c0_i32 = arith.constant 0 : i32
    %c0_i32_0 = arith.constant 0 : i32
    return %arg1, %c0_i32 : i32, i32
  }
  func.func @transform_2(%arg0: i32, %arg1: i32) -> (i32, i32, i32) {
    %c0_i32 = arith.constant 0 : i32
    %c0_i32_0 = arith.constant 0 : i32
    %c0_i32_1 = arith.constant 0 : i32
    return %arg0, %c0_i32, %c0_i32_0 : i32, i32, i32
  }
}

</mosaic_0001>

<llo_original>
// kernel: tpu_custom_call.1
$region0: #{tpu_custom_call.1}
  #allocation0 [shape = 'u32[]', space=smem, size = 0x4, offset = 0x4, fixed_abs, tag = 'smem constant byte address 0x4 - core index']
  #allocation1 [shape = 'u32[144,128]{1,0:T(1,128)}', space=vmem, size = 0x12000, scoped, tag = 'internal scratch']
  #allocation2 [shape = 'f32[8,128]{1,0:T(8,128)}', space=vmem, size = 0x1000, scoped, tag = 'scratch operand']
  %s0 = inlined_call_operand.hbm [shape: f32[8,256], index: 0, kind: input, shape index: {}]
  %s1 = inlined_call_operand.hbm [shape: f32[256,128], index: 1, kind: input, shape index: {}]
  %s2 = inlined_call_operand.hbm [shape: f32[1,1,8], index: 2, kind: output, shape index: {}]
  %s3 = sld [smem:[#allocation0]]
  $region34: #{tpu_custom_call.1} parent=0
    _
  %s5 = ssub.s32 1, %s3
  %s6 = scalar_select 0, %s5, %s3
  $region1: #{tpu_custom_call.1} parent=0
    #allocation3 [shape = 'u8[8192]{0}', space=vmem, size = 0x2000, scoped, tag = 'input window, operand 0, single buffered']
    #allocation4 [shape = 's32[1]{0}', space=sflag, size = 0x4, scoped, tag = 'scoped memory for tpu_custom_call.1']
    #allocation5 [shape = 's32[1]{0}', space=sflag, size = 0x4, scoped, tag = 'scoped memory for tpu_custom_call.1']
    #allocation6 [shape = 'u8[131072]{0}', space=vmem, size = 0x20000, scoped, tag = 'input window, operand 1, single buffered']
    #allocation7 [shape = 's32[1]{0}', space=sflag, size = 0x4, scoped, tag = 'scoped memory for tpu_custom_call.1']
    #allocation8 [shape = 'u8[512]{0}', space=vmem, size = 0x400, scoped, tag = 'output window, operand 0, single buffered']
    %7 = vsyncpa [#allocation4], 0
    %8 = vsyncpa [#allocation7], 0
    %9 = vsyncpa [#allocation5], 0
    // Predicated region
    $region2: #{tpu_custom_call.1} parent=1 // pred_check
      _
    $region3: #{tpu_custom_call.1} parent=1 // pred_check_branch
      %11 = sbr.rel (0) target = $region5
    $region4: #{tpu_custom_call.1} parent=1 // pred_region
      %s13 = ssub.s32 256, 256
      %14 = vsyncadd [#allocation4], %s13
      %s16 = sshll.u32 [#allocation3], 4
      %s17 = int_to_ptr.vmem [resolvable:$true] %s16
      %19 = dma.hbm_to_vmem [thread:$0]  %s0, 256, %s17, [#allocation4]
    $region5: #{tpu_custom_call.1} parent=1 // pred_fallthru
      _
    // Predicated region
    $region6: #{tpu_custom_call.1} parent=1 // pred_check
      _
    $region7: #{tpu_custom_call.1} parent=1 // pred_check_branch
      %21 = sbr.rel (0) target = $region9
    $region8: #{tpu_custom_call.1} parent=1 // pred_region
      %s23 = ssub.s32 4096, 4096
      %24 = vsyncadd [#allocation7], %s23
      %s25 = sshll.u32 [#allocation6], 4
      %s26 = int_to_ptr.vmem [resolvable:$true] %s25
      %31 = dma.hbm_to_vmem [thread:$0]  %s1, 4096, %s26, [#allocation7], 128, 128, 8
    $region9: #{tpu_custom_call.1} parent=1 // pred_fallthru
      _
    // Predicated region
    $region10: #{tpu_custom_call.1} parent=1 // pred_check
      _
    $region11: #{tpu_custom_call.1} parent=1 // pred_check_branch
      %33 = sbr.rel (0) target = $region13
    $region12: #{tpu_custom_call.1} parent=1 // pred_region
      %34 = dma.done [#allocation4], 256
    $region13: #{tpu_custom_call.1} parent=1 // pred_fallthru
      _
    // Predicated region
    $region14: #{tpu_custom_call.1} parent=1 // pred_check
      _
    $region15: #{tpu_custom_call.1} parent=1 // pred_check_branch
      %36 = sbr.rel (0) target = $region17
    $region16: #{tpu_custom_call.1} parent=1 // pred_region
      %37 = dma.done [#allocation7], 4096
    $region17: #{tpu_custom_call.1} parent=1 // pred_fallthru
      _
    %p38 = scmp.eq.s32.totalorder 0, 0
    // Predicated region
    $region18: #{tpu_custom_call.1} parent=1 // pred_check
      %p39 = pneg %p38
    $region19: #{tpu_custom_call.1} parent=1 // pred_check_branch
      %41 = sbr.rel (%p39) target = $region21
    $region20: #{tpu_custom_call.1} parent=1 // pred_region
      %42 = vst [vmem:[#allocation2] sm:$0xff] 0.0
    $region21: #{tpu_custom_call.1} parent=1 // pred_fallthru
      _
    %v43 = vld [vmem:[#allocation2] sm:$0xff]
    %v44 = vld [vmem:[#allocation3] sm:$0xff]
    %v45 = vld [vmem:[#allocation3 + $0x8] sm:$0xff]
    %v46 = vld [vmem:[#allocation6] sm:$0xff]
    %v47 = vld [vmem:[#allocation6 + $0x8] sm:$0xff]
    %v48 = vld [vmem:[#allocation6 + $0x10] sm:$0xff]
    %v49 = vld [vmem:[#allocation6 + $0x18] sm:$0xff]
    %v50 = vld [vmem:[#allocation6 + $0x20] sm:$0xff]
    %v51 = vld [vmem:[#allocation6 + $0x28] sm:$0xff]
    %v52 = vld [vmem:[#allocation6 + $0x30] sm:$0xff]
    %v53 = vld [vmem:[#allocation6 + $0x38] sm:$0xff]
    %v54 = vld [vmem:[#allocation6 + $0x40] sm:$0xff]
    %v55 = vld [vmem:[#allocation6 + $0x48] sm:$0xff]
    %v56 = vld [vmem:[#allocation6 + $0x50] sm:$0xff]
    %v57 = vld [vmem:[#allocation6 + $0x58] sm:$0xff]
    %v58 = vld [vmem:[#allocation6 + $0x60] sm:$0xff]
    %v59 = vld [vmem:[#allocation6 + $0x68] sm:$0xff]
    %v60 = vld [vmem:[#allocation6 + $0x70] sm:$0xff]
    %v61 = vld [vmem:[#allocation6 + $0x78] sm:$0xff]
    %v62 = vld [vmem:[#allocation6 + $0x80] sm:$0xff]
    %v63 = vld [vmem:[#allocation6 + $0x88] sm:$0xff]
    %v64 = vld [vmem:[#allocation6 + $0x90] sm:$0xff]
    %v65 = vld [vmem:[#allocation6 + $0x98] sm:$0xff]
    %v66 = vld [vmem:[#allocation6 + $0xa0] sm:$0xff]
    %v67 = vld [vmem:[#allocation6 + $0xa8] sm:$0xff]
    %v68 = vld [vmem:[#allocation6 + $0xb0] sm:$0xff]
    %v69 = vld [vmem:[#allocation6 + $0xb8] sm:$0xff]
    %v70 = vld [vmem:[#allocation6 + $0xc0] sm:$0xff]
    %v71 = vld [vmem:[#allocation6 + $0xc8] sm:$0xff]
    %v72 = vld [vmem:[#allocation6 + $0xd0] sm:$0xff]
    %v73 = vld [vmem:[#allocation6 + $0xd8] sm:$0xff]
    %v74 = vld [vmem:[#allocation6 + $0xe0] sm:$0xff]
    %v75 = vld [vmem:[#allocation6 + $0xe8] sm:$0xff]
    %v76 = vld [vmem:[#allocation6 + $0xf0] sm:$0xff]
    %v77 = vld [vmem:[#allocation6 + $0xf8] sm:$0xff]
    %78 = vmatprep.subr.mxu0 0.0
    %79 = vmatpush1.msra.mxu0 %v46
    %80 = vmatprep.subr.mxu0 0.0
    %81 = vmatpush1.msra.mxu0 %v47
    %82 = vmatprep.subr.mxu0 0.0
    %83 = vmatpush1.msra.mxu0 %v48
    %84 = vmatprep.subr.mxu0 0.0
    %85 = vmatpush1.msra.mxu0 %v49
    %86 = vmatprep.subr.mxu0 0.0
    %87 = vmatpush1.msra.mxu0 %v50
    %88 = vmatprep.subr.mxu0 0.0
    %89 = vmatpush1.msra.mxu0 %v51
    %90 = vmatprep.subr.mxu0 0.0
    %91 = vmatpush1.msra.mxu0 %v52
    %92 = vmatprep.subr.mxu0 0.0
    %93 = vmatpush1.msra.mxu0 %v53
    %94 = vmatprep.subr.mxu0 0.0
    %95 = vmatpush1.msra.mxu0 %v54
    %96 = vmatprep.subr.mxu0 0.0
    %97 = vmatpush1.msra.mxu0 %v55
    %98 = vmatprep.subr.mxu0 0.0
    %99 = vmatpush1.msra.mxu0 %v56
    %100 = vmatprep.subr.mxu0 0.0
    %101 = vmatpush1.msra.mxu0 %v57
    %102 = vmatprep.subr.mxu0 0.0
    %103 = vmatpush1.msra.mxu0 %v58
    %104 = vmatprep.subr.mxu0 0.0
    %105 = vmatpush1.msra.mxu0 %v59
    %106 = vmatprep.subr.mxu0 0.0
    %107 = vmatpush1.msra.mxu0 %v60
    %108 = vmatprep.subr.mxu0 0.0
    %109 = vmatpush1.msra.mxu0 %v61
    %110 = vmatprep.subr.mxu0 0.0
    %111 = vmatpush1.msra.mxu0 %v62
    %112 = vmatprep.subr.mxu0 0.0
    %113 = vmatpush1.msra.mxu0 %v63
    %114 = vmatprep.subr.mxu0 0.0
    %115 = vmatpush1.msra.mxu0 %v64
    %116 = vmatprep.subr.mxu0 0.0
    %117 = vmatpush1.msra.mxu0 %v65
    %118 = vmatprep.subr.mxu0 0.0
    %119 = vmatpush1.msra.mxu0 %v66
    %120 = vmatprep.subr.mxu0 0.0
    %121 = vmatpush1.msra.mxu0 %v67
    %122 = vmatprep.subr.mxu0 0.0
    %123 = vmatpush1.msra.mxu0 %v68
    %124 = vmatprep.subr.mxu0 0.0
    %125 = vmatpush1.msra.mxu0 %v69
    %126 = vmatprep.subr.mxu0 0.0
    %127 = vmatpush1.msra.mxu0 %v70
    %128 = vmatprep.subr.mxu0 0.0
    %129 = vmatpush1.msra.mxu0 %v71
    %130 = vmatprep.subr.mxu0 0.0
    %131 = vmatpush1.msra.mxu0 %v72
    %132 = vmatprep.subr.mxu0 0.0
    %133 = vmatpush1.msra.mxu0 %v73
    %134 = vmatprep.subr.mxu0 0.0
    %135 = vmatpush1.msra.mxu0 %v74
    %136 = vmatprep.subr.mxu0 0.0
    %137 = vmatpush1.msra.mxu0 %v75
    %138 = vmatprep.subr.mxu0 0.0
    %139 = vmatpush1.msra.mxu0 %v76
    %140 = vmatprep.subr.mxu0 0.0
    %141 = vmatpush1.msra.mxu0 %v77
    %142 = vmatprep.mubr.f32.mxu0 %v45
    %143 = vmatmul.mubr.f32.gmra.mrb[0].mxu0 %v44
    %v144 = vpop.f32.mrb[0].mxu0
    %v145 = vadd.f32 0.0, %v144
    %v146 = vpop.f32.mrb[0].mxu0
    %147 = vdwg.mxu0
    %v148 = vadd.f32 %v43, %v145
    %149 = vst [vmem:[#allocation2] sm:$0xff] %v148
    // Predicated region
    $region22: #{tpu_custom_call.1} parent=1 // pred_check
      %p150 = pneg %p38
    $region23: #{tpu_custom_call.1} parent=1 // pred_check_branch
      %152 = sbr.rel (%p150) target = $region25
    $region24: #{tpu_custom_call.1} parent=1 // pred_region
      %v153 = vld [vmem:[#allocation2] sm:$0xff]
      %v154 = vmul.f32 %v153, %v153
      %155 = vadd.xlane.f32.xlu0 %v154
      %v156 = vpop.xlane.xlu0 %155
      %v158 = vlaneseq
      %v159 = vand.u32 %v158, 127
      %v160 = vlaneseq
      %v161 = vshrl.u32 %v160, 7
      %v162 = vsub.s32 %v159, %v161
      %v163 = vrot.slane %v156, %v162
      %vm165 = vcmask 57344
      %166 = vst.msk [vmem:[#allocation8] sm:$0x1] %vm165, %v163
    $region25: #{tpu_custom_call.1} parent=1 // pred_fallthru
      _
    // Predicated region
    $region26: #{tpu_custom_call.1} parent=1 // pred_check
      _
    $region27: #{tpu_custom_call.1} parent=1 // pred_check_branch
      %168 = sbr.rel (0) target = $region29
    $region28: #{tpu_custom_call.1} parent=1 // pred_region
      %s170 = ssub.s32 16, 16
      %171 = vsyncadd [#allocation5], %s170
      %s173 = sshll.u32 [#allocation8], 4
      %s174 = int_to_ptr.vmem [resolvable:$true] %s173
      %176 = dma.vmem_to_hbm [thread:$0]  %s174, 16, %s2, [#allocation5]
    $region29: #{tpu_custom_call.1} parent=1 // pred_fallthru
      _
    // Predicated region
    $region30: #{tpu_custom_call.1} parent=1 // pred_check
      _
    $region31: #{tpu_custom_call.1} parent=1 // pred_check_branch
      %178 = sbr.rel (0) target = $region33
    $region32: #{tpu_custom_call.1} parent=1 // pred_region
      %179 = dma.done [#allocation5], 16
    $region33: #{tpu_custom_call.1} parent=1 // pred_fallthru
      _
    %180 = vsyncpa [#allocation4], 1
    %181 = vsyncpa [#allocation7], 1
    %182 = vsyncpa [#allocation5], 1

</llo_original>
